<compile_context>
chip_gen: v6e
topology: v6e:2x2x1
jax: 0.10.0
libtpu: 0.0.40
codegen_flags: <defaults>
</compile_context>

<pallas_src>
import functools

import jax
import jax.numpy as jnp
from jax.experimental import pallas as pl
from jax.experimental.pallas import tpu as pltpu


def _round_up(x, m):
    return ((x + m - 1) // m) * m


def _cdiv(a, b):
    return (a + b - 1) // b


def _qnet_kernel(*refs, n_layers, compute_dtype):
    """Whole MLP fused in one kernel, feature-major layout.

    refs = (x_ref, wt0, b0, wt1, b1, ..., o_ref)
      x_ref : (in_dim, bt)   activations, batch on the 128-lane axis
      wt_i  : (out_i, in_i)  PyTorch nn.Linear weight orientation
      b_i   : (out_i, 1)     broadcasts over the batch lanes
      o_ref : (out_pad, bt)  out_pad = out_dim rounded up to 8 (f32 sublane)
    """
    x_ref = refs[0]
    o_ref = refs[-1]

    h = x_ref[...]
    for i in range(n_layers):
        wt = refs[1 + 2 * i][...]
        b = refs[2 + 2 * i][...]
        # MXU matmul; accumulate in f32 regardless of compute_dtype.
        h = jnp.dot(wt, h.astype(compute_dtype),
                    preferred_element_type=jnp.float32)
        h = h + b  # (out_i, 1) broadcasts over batch lanes; f32 elementwise
        if i < n_layers - 1:
            h = jnp.maximum(h, 0.0)
            # TODO(synk): training-mode stochastic dropout (pltpu.prng_random_bits
            # mask) not wired in; this matches eval()/inference semantics.
    o_ref[...] = h.astype(o_ref.dtype)


def qnet_forward(x, params, *, batch_tile=1024, compute_dtype=jnp.float32):
    """QNet.forward as one fused pallas_call.

    params: list of (W, b) with W shaped (out_features, in_features) and b
    shaped (out_features, 1) -- same orientation as PyTorch nn.Linear.
    Returns (batch, out_features) float32, matching the torch module output.
    """
    n_layers = len(params)
    batch, in_dim = x.shape
    out_dim = params[-1][0].shape[0]
    assert params[0][0].shape[1] == in_dim

    # --- parameter prep ---------------------------------------------------
    # Pad the final layer's output features to the f32 sublane multiple (8)
    # so the (out_pad, bt) output tile is a fully dense vreg store.
    out_pad = _round_up(out_dim, 8)
    prepped = []
    for li, (w, b) in enumerate(params):
        if li == n_layers - 1 and out_pad != out_dim:
            w = jnp.zeros((out_pad, w.shape[1]), w.dtype).at[:out_dim].set(w)
            b = jnp.zeros((out_pad, 1), b.dtype).at[:out_dim].set(b)
        prepped.append((w.astype(compute_dtype), b.astype(jnp.float32)))

    # --- batch tiling -----------------------------------------------------
    # Batch lives on lanes -> pad to a multiple of 128.  Batches up to
    # batch_tile take the no-grid path; larger batches are tiled with an
    # EVEN number of tiles so the "parallel" axis balances across v7x's
    # two TensorCores.
    batch_tile = _round_up(max(batch_tile, 128), 128)
    pb = _round_up(batch, 128)
    if pb <= batch_tile:
        n_tiles, tile = 1, pb
    else:
        n_tiles = _cdiv(pb, batch_tile)
        if n_tiles % 2:
            n_tiles += 1
        tile = _round_up(_cdiv(pb, n_tiles), 128)
        pb = n_tiles * tile

    # Transpose once outside (cheap: in_dim is tiny) and zero-pad the batch.
    x_t = x.T.astype(compute_dtype)
    if pb != batch:
        x_t = jnp.zeros((in_dim, pb), compute_dtype).at[:, :batch].set(x_t)

    flat_args = [x_t]
    for w, b in prepped:
        flat_args.extend((w, b))

    kernel = functools.partial(
        _qnet_kernel, n_layers=n_layers, compute_dtype=compute_dtype)
    out_shape = jax.ShapeDtypeStruct((out_pad, pb), jnp.float32)

    if n_tiles == 1:
        # Single fused call, no grid, full-array blocks.  Everything (weights,
        # activations, output) is a few tens of KiB of VMEM at most.  This
        # path is launch-latency bound for tiny RL batches: amortize at the
        # call site by batching environment states, not by in-kernel tuning.
        out_t = pl.pallas_call(kernel, out_shape=out_shape)(*flat_args)
    else:
        # Batch-tiled path: only x / y scale with batch, so tile those and
        # keep the tiny, grid-invariant weights as full resident VMEM blocks.
        in_specs = [pl.BlockSpec((in_dim, tile), lambda i: (0, i))]
        for w, b in prepped:
            in_specs.append(pl.BlockSpec(w.shape, lambda i: (0, 0)))
            in_specs.append(pl.BlockSpec(b.shape, lambda i: (0, 0)))
        out_t = pl.pallas_call(
            kernel,
            out_shape=out_shape,
            grid=(n_tiles,),
            in_specs=in_specs,
            out_specs=pl.BlockSpec((out_pad, tile), lambda i: (0, i)),
            compiler_params=pltpu.CompilerParams(
                # Per-step residency ~tile*48 B << 16 MiB (v5e default scope),
                # so no vmem_limit_bytes override is needed.
                dimension_semantics=("parallel",),
            ),
        )(*flat_args)

    # Back to PyTorch's (batch, out_features) layout; drop pad rows/cols.
    return out_t[:out_dim, :batch].T


def init_qnet_params(key, input_size, hidden_sizes, output_size):
    """Deterministic init matching QNet.__init__ shapes (PyTorch orientation)."""
    layer_sizes = [input_size] + list(hidden_sizes) + [output_size]
    params = []
    for i in range(len(layer_sizes) - 1):
        fan_in, fan_out = layer_sizes[i], layer_sizes[i + 1]
        key, wk, bk = jax.random.split(key, 3)
        bound = 1.0 / float(fan_in) ** 0.5
        w = jax.random.uniform(wk, (fan_out, fan_in), jnp.float32, -bound, bound)
        b = jax.random.uniform(bk, (fan_out, 1), jnp.float32, -bound, bound)
        params.append((w, b))
    return params


if __name__ == "__main__":
    # Flappy-bird-style Q-net: small state vector in, 2 actions out.
    input_size = 8
    hidden_sizes = [32, 32]
    output_size = 2

    key = jax.random.PRNGKey(0)
    pkey, k1, k2 = jax.random.split(key, 3)
    params = init_qnet_params(pkey, input_size, hidden_sizes, output_size)

    def ref_forward(xv):
        h = xv
        for i, (w, b) in enumerate(params):
            h = h @ w.T + b.T
            if i < len(params) - 1:
                h = jnp.maximum(h, 0.0)
        return h

    # 1) Tiny RL-style batch: single fused no-grid call.
    x_small = jax.random.normal(k1, (2, input_size), jnp.float32)
    out_small = jax.block_until_ready(qnet_forward(x_small, params))
    assert out_small.shape == (2, output_size)
    assert jnp.allclose(out_small, ref_forward(x_small), atol=1e-4, rtol=1e-4)

    # 2) Mid batch (300) still fits a single tile with the raised default
    #    batch_tile=1024 -> no grid, no per-step overhead.
    x_mid = jax.random.normal(k2, (300, input_size), jnp.float32)
    out_mid = jax.block_until_ready(qnet_forward(x_mid, params))
    assert out_mid.shape == (300, output_size)
    assert jnp.allclose(out_mid, ref_forward(x_mid), atol=1e-4, rtol=1e-4)

    # 3) Larger batch with a small tile to exercise the batch-tiled
    #    "parallel" path (even tile count for v7x's two TensorCores).
    x_big = jax.random.normal(k2, (1300, input_size), jnp.float32)
    out_big = jax.block_until_ready(qnet_forward(x_big, params, batch_tile=256))
    assert out_big.shape == (1300, output_size)
    assert jnp.allclose(out_big, ref_forward(x_big), atol=1e-4, rtol=1e-4)

    # 4) Same, with bf16 inputs/weights (f32 accumulation / bias / ReLU).
    out_bf16 = jax.block_until_ready(
        qnet_forward(x_big, params, batch_tile=256,
                     compute_dtype=jnp.bfloat16))
    assert out_bf16.shape == (1300, output_size)
    assert jnp.allclose(out_bf16, ref_forward(x_big), atol=5e-2, rtol=5e-2)

    print("KERNEL_OK")
</pallas_src>

<mosaic_0001>
module attributes {stable_mosaic.version = 11 : i64} {
  func.func @_qnet_kernel(%arg0: memref<8x128xf32, #tpu.memory_space<vmem>>, %arg1: memref<32x8xf32, #tpu.memory_space<vmem>>, %arg2: memref<32x1xf32, #tpu.memory_space<vmem>>, %arg3: memref<32x32xf32, #tpu.memory_space<vmem>>, %arg4: memref<32x1xf32, #tpu.memory_space<vmem>>, %arg5: memref<8x32xf32, #tpu.memory_space<vmem>>, %arg6: memref<8x1xf32, #tpu.memory_space<vmem>>, %arg7: memref<8x128xf32, #tpu.memory_space<vmem>>) attributes {dimension_semantics = [], scalar_prefetch = 0 : i64, scratch_operands = 0 : i64, tpu.core_type = #tpu.core_type<tc>} {
    %c0 = arith.constant 0 : index
    %c0_0 = arith.constant 0 : index
    %0 = vector.load %arg0[%c0, %c0_0] : memref<8x128xf32, #tpu.memory_space<vmem>>, vector<8x128xf32>
    %c0_1 = arith.constant 0 : index
    %c0_2 = arith.constant 0 : index
    %1 = vector.load %arg1[%c0_1, %c0_2] : memref<32x8xf32, #tpu.memory_space<vmem>>, vector<32x8xf32>
    %c0_3 = arith.constant 0 : index
    %c0_4 = arith.constant 0 : index
    %2 = vector.load %arg2[%c0_3, %c0_4] : memref<32x1xf32, #tpu.memory_space<vmem>>, vector<32x1xf32>
    %cst = arith.constant dense<0.000000e+00> : vector<32x128xf32>
    %3 = tpu.matmul %1, %0, %cst {dimension_numbers = #tpu.dot_dimension_numbers<[1], [0], [0], [1], [0, 0, 1, 1], [], []>} : vector<32x8xf32>, vector<8x128xf32>, vector<32x128xf32> -> vector<32x128xf32>
    %4 = vector.broadcast %2 : vector<32x1xf32> to vector<32x128xf32>
    %5 = arith.addf %3, %4 : vector<32x128xf32>
    %cst_5 = arith.constant 0.000000e+00 : f32
    %6 = vector.broadcast %cst_5 : f32 to vector<32x128xf32>
    %7 = arith.maximumf %5, %6 : vector<32x128xf32>
    %c0_6 = arith.constant 0 : index
    %c0_7 = arith.constant 0 : index
    %8 = vector.load %arg3[%c0_6, %c0_7] : memref<32x32xf32, #tpu.memory_space<vmem>>, vector<32x32xf32>
    %c0_8 = arith.constant 0 : index
    %c0_9 = arith.constant 0 : index
    %9 = vector.load %arg4[%c0_8, %c0_9] : memref<32x1xf32, #tpu.memory_space<vmem>>, vector<32x1xf32>
    %cst_10 = arith.constant dense<0.000000e+00> : vector<32x128xf32>
    %10 = tpu.matmul %8, %7, %cst_10 {dimension_numbers = #tpu.dot_dimension_numbers<[1], [0], [0], [1], [0, 0, 1, 1], [], []>} : vector<32x32xf32>, vector<32x128xf32>, vector<32x128xf32> -> vector<32x128xf32>
    %11 = vector.broadcast %9 : vector<32x1xf32> to vector<32x128xf32>
    %12 = arith.addf %10, %11 : vector<32x128xf32>
    %cst_11 = arith.constant 0.000000e+00 : f32
    %13 = vector.broadcast %cst_11 : f32 to vector<32x128xf32>
    %14 = arith.maximumf %12, %13 : vector<32x128xf32>
    %c0_12 = arith.constant 0 : index
    %c0_13 = arith.constant 0 : index
    %15 = vector.load %arg5[%c0_12, %c0_13] : memref<8x32xf32, #tpu.memory_space<vmem>>, vector<8x32xf32>
    %c0_14 = arith.constant 0 : index
    %c0_15 = arith.constant 0 : index
    %16 = vector.load %arg6[%c0_14, %c0_15] : memref<8x1xf32, #tpu.memory_space<vmem>>, vector<8x1xf32>
    %cst_16 = arith.constant dense<0.000000e+00> : vector<8x128xf32>
    %17 = tpu.matmul %15, %14, %cst_16 {dimension_numbers = #tpu.dot_dimension_numbers<[1], [0], [0], [1], [0, 0, 1, 1], [], []>} : vector<8x32xf32>, vector<32x128xf32>, vector<8x128xf32> -> vector<8x128xf32>
    %18 = vector.broadcast %16 : vector<8x1xf32> to vector<8x128xf32>
    %19 = arith.addf %17, %18 : vector<8x128xf32>
    %c0_17 = arith.constant 0 : index
    %c0_18 = arith.constant 0 : index
    %20 = vector.load %arg7[%c0_17, %c0_18] : memref<8x128xf32, #tpu.memory_space<vmem>>, vector<8x128xf32>
    tpu.vector_store %arg7[%c0_17, %c0_18], %19 {strides = array<i32>} : memref<8x128xf32, #tpu.memory_space<vmem>>, vector<8x128xf32>,
    return
  }
}

</mosaic_0001>

<llo_original>
// kernel: tpu_custom_call.1
$region0: #{tpu_custom_call.1}
  #allocation0 [shape = 'u32[]', space=smem, size = 0x4, offset = 0x4, fixed_abs, tag = 'smem constant byte address 0x4 - core index']
  #allocation1 [shape = 'u32[144,128]{1,0:T(1,128)}', space=vmem, size = 0x12000, scoped, tag = 'internal scratch']
  %s0 = inlined_call_operand.vmem [shape: f32[8,128], index: 0, kind: input, shape index: {}]
  %s1 = inlined_call_operand.vmem [shape: f32[32,8], index: 1, kind: input, shape index: {}]
  %s2 = inlined_call_operand.vmem [shape: f32[32,1], index: 2, kind: input, shape index: {}]
  %s3 = inlined_call_operand.vmem [shape: f32[32,32], index: 3, kind: input, shape index: {}]
  %s4 = inlined_call_operand.vmem [shape: f32[32,1], index: 4, kind: input, shape index: {}]
  %s5 = inlined_call_operand.vmem [shape: f32[8,32], index: 5, kind: input, shape index: {}]
  %s6 = inlined_call_operand.vmem [shape: f32[8,1], index: 6, kind: input, shape index: {}]
  %s7 = inlined_call_operand.hbm [shape: f32[8,128], index: 7, kind: output, shape index: {}]
  %s8 = sld [smem:[#allocation0]]
  $region38: #{tpu_custom_call.1} parent=0
    _
  %s10 = ssub.s32 1, %s8
  %s11 = scalar_select 0, %s10, %s8
  $region1: #{tpu_custom_call.1} parent=0
    #allocation2 [shape = 'u8[4096]{0}', space=vmem, size = 0x1000, scoped, tag = 'output window, operand 0, single buffered']
    #allocation3 [shape = 's32[1]{0}', space=sflag, size = 0x4, scoped, tag = 'scoped memory for tpu_custom_call.1']
    %12 = vsyncpa [#allocation3], 0
    // Predicated region
    $region2: #{tpu_custom_call.1} parent=1 // pred_check
      _
    $region3: #{tpu_custom_call.1} parent=1 // pred_check_branch
      %14 = sbr.rel (0) target = $region5
    $region4: #{tpu_custom_call.1} parent=1 // pred_region
      _
    $region5: #{tpu_custom_call.1} parent=1 // pred_fallthru
      _
    // Predicated region
    $region6: #{tpu_custom_call.1} parent=1 // pred_check
      _
    $region7: #{tpu_custom_call.1} parent=1 // pred_check_branch
      %16 = sbr.rel (0) target = $region9
    $region8: #{tpu_custom_call.1} parent=1 // pred_region
      _
    $region9: #{tpu_custom_call.1} parent=1 // pred_fallthru
      _
    // Predicated region
    $region10: #{tpu_custom_call.1} parent=1 // pred_check
      _
    $region11: #{tpu_custom_call.1} parent=1 // pred_check_branch
      %18 = sbr.rel (0) target = $region13
    $region12: #{tpu_custom_call.1} parent=1 // pred_region
      _
    $region13: #{tpu_custom_call.1} parent=1 // pred_fallthru
      _
    // Predicated region
    $region14: #{tpu_custom_call.1} parent=1 // pred_check
      _
    $region15: #{tpu_custom_call.1} parent=1 // pred_check_branch
      %20 = sbr.rel (0) target = $region17
    $region16: #{tpu_custom_call.1} parent=1 // pred_region
      _
    $region17: #{tpu_custom_call.1} parent=1 // pred_fallthru
      _
    // Predicated region
    $region18: #{tpu_custom_call.1} parent=1 // pred_check
      _
    $region19: #{tpu_custom_call.1} parent=1 // pred_check_branch
      %22 = sbr.rel (0) target = $region21
    $region20: #{tpu_custom_call.1} parent=1 // pred_region
      _
    $region21: #{tpu_custom_call.1} parent=1 // pred_fallthru
      _
    // Predicated region
    $region22: #{tpu_custom_call.1} parent=1 // pred_check
      _
    $region23: #{tpu_custom_call.1} parent=1 // pred_check_branch
      %24 = sbr.rel (0) target = $region25
    $region24: #{tpu_custom_call.1} parent=1 // pred_region
      _
    $region25: #{tpu_custom_call.1} parent=1 // pred_fallthru
      _
    // Predicated region
    $region26: #{tpu_custom_call.1} parent=1 // pred_check
      _
    $region27: #{tpu_custom_call.1} parent=1 // pred_check_branch
      %26 = sbr.rel (0) target = $region29
    $region28: #{tpu_custom_call.1} parent=1 // pred_region
      _
    $region29: #{tpu_custom_call.1} parent=1 // pred_fallthru
      _
    %v27 = vld [vmem:[%s0] sm:$0xff]
    %v28 = vld [vmem:[%s1] sm:$0xff]
    %v29 = vld [vmem:[%s1 + $0x8] sm:$0xff]
    %v30 = vld [vmem:[%s1 + $0x10] sm:$0xff]
    %v31 = vld [vmem:[%s1 + $0x18] sm:$0xff]
    %v32 = vld [vmem:[%s2] sm:$0xff]
    %v33 = vld [vmem:[%s2 + $0x8] sm:$0xff]
    %v34 = vld [vmem:[%s2 + $0x10] sm:$0xff]
    %v35 = vld [vmem:[%s2 + $0x18] sm:$0xff]
    %37 = vset.pattern.permute.xlu0 0
    %38 = vperm.xlu0 %37, %v32
    %v39 = vpop.permute.xlu0 %38
    %42 = vset.pattern.permute.xlu0 0
    %43 = vperm.xlu0 %42, %v33
    %v44 = vpop.permute.xlu0 %43
    %47 = vset.pattern.permute.xlu0 0
    %48 = vperm.xlu0 %47, %v34
    %v49 = vpop.permute.xlu0 %48
    %52 = vset.pattern.permute.xlu0 0
    %53 = vperm.xlu0 %52, %v35
    %v54 = vpop.permute.xlu0 %53
    %vm56 = vcmask 64512
    %v58 = vsel %vm56, %v28, 0
    %v61 = vsel %vm56, %v29, 0
    %v64 = vsel %vm56, %v30, 0
    %v67 = vsel %vm56, %v31, 0
    %69 = vmatprep.subr.mxu0 0.0
    %70 = vmatpush1.msra.mxu0 0.0
    %71 = vmatprep.subr.mxu0 0.0
    %72 = vmatpush1.msra.mxu0 0.0
    %73 = vmatprep.subr.mxu0 0.0
    %74 = vmatpush1.msra.mxu0 0.0
    %75 = vmatprep.subr.mxu0 0.0
    %76 = vmatpush1.msra.mxu0 0.0
    %77 = vmatprep.subr.mxu0 0.0
    %78 = vmatpush1.msra.mxu0 0.0
    %79 = vmatprep.subr.mxu0 0.0
    %80 = vmatpush1.msra.mxu0 0.0
    %81 = vmatprep.subr.mxu0 0.0
    %82 = vmatpush1.msra.mxu0 0.0
    %83 = vmatprep.subr.mxu0 0.0
    %84 = vmatpush1.msra.mxu0 0.0
    %85 = vmatprep.subr.mxu0 0.0
    %86 = vmatpush1.msra.mxu0 0.0
    %87 = vmatprep.subr.mxu0 0.0
    %88 = vmatpush1.msra.mxu0 0.0
    %89 = vmatprep.subr.mxu0 0.0
    %90 = vmatpush1.msra.mxu0 0.0
    %91 = vmatprep.subr.mxu0 0.0
    %92 = vmatpush1.msra.mxu0 0.0
    %93 = vmatprep.subr.mxu0 0.0
    %94 = vmatpush1.msra.mxu0 0.0
    %95 = vmatprep.subr.mxu0 0.0
    %96 = vmatpush1.msra.mxu0 0.0
    %97 = vmatprep.subr.mxu0 0.0
    %98 = vmatpush1.msra.mxu0 0.0
    %99 = vmatprep.subr.mxu0 0.0
    %100 = vmatpush1.msra.mxu0 %v27
    %101 = vmatprep.subr.mxu0 0.0
    %102 = vmatpush2.msra.mxu0 0.0
    %103 = vmatprep.subr.mxu0 0.0
    %104 = vmatpush2.msra.mxu0 0.0
    %105 = vmatprep.subr.mxu0 0.0
    %106 = vmatpush2.msra.mxu0 0.0
    %107 = vmatprep.subr.mxu0 0.0
    %108 = vmatpush2.msra.mxu0 0.0
    %109 = vmatprep.subr.mxu0 0.0
    %110 = vmatpush2.msra.mxu0 0.0
    %111 = vmatprep.subr.mxu0 0.0
    %112 = vmatpush2.msra.mxu0 0.0
    %113 = vmatprep.subr.mxu0 0.0
    %114 = vmatpush2.msra.mxu0 0.0
    %115 = vmatprep.subr.mxu0 0.0
    %116 = vmatpush2.msra.mxu0 0.0
    %117 = vmatprep.subr.mxu0 0.0
    %118 = vmatpush2.msra.mxu0 0.0
    %119 = vmatprep.subr.mxu0 0.0
    %120 = vmatpush2.msra.mxu0 0.0
    %121 = vmatprep.subr.mxu0 0.0
    %122 = vmatpush2.msra.mxu0 0.0
    %123 = vmatprep.subr.mxu0 0.0
    %124 = vmatpush2.msra.mxu0 0.0
    %125 = vmatprep.subr.mxu0 0.0
    %126 = vmatpush2.msra.mxu0 0.0
    %127 = vmatprep.subr.mxu0 0.0
    %128 = vmatpush2.msra.mxu0 0.0
    %129 = vmatprep.subr.mxu0 0.0
    %130 = vmatpush2.msra.mxu0 0.0
    %131 = vmatprep.subr.mxu0 0.0
    %132 = vmatpush2.msra.mxu0 0.0
    %133 = vmatprep.mubr.f32.mxu0 0.0
    %134 = vmatmul.mubr.f32.gmra.mxu0 %v58
    %v135 = vpop.f32.mrf.mxu0
    %v136 = vadd.f32 %v39, %v135
    %v137 = vpop.f32.mrf.mxu0
    %138 = vmatprep.mubr.f32.mxu0 0.0
    %139 = vmatmul.mubr.f32.gmra.mxu0 %v61
    %v140 = vpop.f32.mrf.mxu0
    %v141 = vadd.f32 %v44, %v140
    %v142 = vpop.f32.mrf.mxu0
    %143 = vmatprep.mubr.f32.mxu0 0.0
    %144 = vmatmul.mubr.f32.gmra.mxu0 %v64
    %v145 = vpop.f32.mrf.mxu0
    %v146 = vadd.f32 %v49, %v145
    %v147 = vpop.f32.mrf.mxu0
    %148 = vmatprep.mubr.f32.mxu0 0.0
    %149 = vmatmul.mubr.f32.gmra.mxu0 %v67
    %v150 = vpop.f32.mrf.mxu0
    %v151 = vadd.f32 %v54, %v150
    %v152 = vpop.f32.mrf.mxu0
    %153 = vdwg.mxu0
    %v154 = vmax.f32 %v136, 0.0
    %v155 = vmax.f32 %v141, 0.0
    %v156 = vmax.f32 %v146, 0.0
    %v157 = vmax.f32 %v151, 0.0
    %v158 = vld [vmem:[%s3] sm:$0xff]
    %v159 = vld [vmem:[%s3 + $0x8] sm:$0xff]
    %v160 = vld [vmem:[%s3 + $0x10] sm:$0xff]
    %v161 = vld [vmem:[%s3 + $0x18] sm:$0xff]
    %v162 = vld [vmem:[%s4] sm:$0xff]
    %v163 = vld [vmem:[%s4 + $0x8] sm:$0xff]
    %v164 = vld [vmem:[%s4 + $0x10] sm:$0xff]
    %v165 = vld [vmem:[%s4 + $0x18] sm:$0xff]
    %167 = vset.pattern.permute.xlu0 0
    %168 = vperm.xlu0 %167, %v162
    %v169 = vpop.permute.xlu0 %168
    %172 = vset.pattern.permute.xlu0 0
    %173 = vperm.xlu0 %172, %v163
    %v174 = vpop.permute.xlu0 %173
    %177 = vset.pattern.permute.xlu0 0
    %178 = vperm.xlu0 %177, %v164
    %v179 = vpop.permute.xlu0 %178
    %182 = vset.pattern.permute.xlu0 0
    %183 = vperm.xlu0 %182, %v165
    %v184 = vpop.permute.xlu0 %183
    %vm186 = vcmask 261120
    %v188 = vsel %vm186, %v158, 0
    %v191 = vsel %vm186, %v159, 0
    %v194 = vsel %vm186, %v160, 0
    %v197 = vsel %vm186, %v161, 0
    %199 = vmatprep.subr.mxu0 0.0
    %200 = vmatpush1.msra.mxu0 0.0
    %201 = vmatprep.subr.mxu0 0.0
    %202 = vmatpush1.msra.mxu0 0.0
    %203 = vmatprep.subr.mxu0 0.0
    %204 = vmatpush1.msra.mxu0 0.0
    %205 = vmatprep.subr.mxu0 0.0
    %206 = vmatpush1.msra.mxu0 0.0
    %207 = vmatprep.subr.mxu0 0.0
    %208 = vmatpush1.msra.mxu0 0.0
    %209 = vmatprep.subr.mxu0 0.0
    %210 = vmatpush1.msra.mxu0 0.0
    %211 = vmatprep.subr.mxu0 0.0
    %212 = vmatpush1.msra.mxu0 0.0
    %213 = vmatprep.subr.mxu0 0.0
    %214 = vmatpush1.msra.mxu0 0.0
    %215 = vmatprep.subr.mxu0 0.0
    %216 = vmatpush1.msra.mxu0 0.0
    %217 = vmatprep.subr.mxu0 0.0
    %218 = vmatpush1.msra.mxu0 0.0
    %219 = vmatprep.subr.mxu0 0.0
    %220 = vmatpush1.msra.mxu0 0.0
    %221 = vmatprep.subr.mxu0 0.0
    %222 = vmatpush1.msra.mxu0 0.0
    %223 = vmatprep.subr.mxu0 0.0
    %224 = vmatpush1.msra.mxu0 %v157
    %225 = vmatprep.subr.mxu0 0.0
    %226 = vmatpush1.msra.mxu0 %v156
    %227 = vmatprep.subr.mxu0 0.0
    %228 = vmatpush1.msra.mxu0 %v155
    %229 = vmatprep.subr.mxu0 0.0
    %230 = vmatpush1.msra.mxu0 %v154
    %231 = vmatprep.subr.mxu0 0.0
    %232 = vmatpush2.msra.mxu0 0.0
    %233 = vmatprep.subr.mxu0 0.0
    %234 = vmatpush2.msra.mxu0 0.0
    %235 = vmatprep.subr.mxu0 0.0
    %236 = vmatpush2.msra.mxu0 0.0
    %237 = vmatprep.subr.mxu0 0.0
    %238 = vmatpush2.msra.mxu0 0.0
    %239 = vmatprep.subr.mxu0 0.0
    %240 = vmatpush2.msra.mxu0 0.0
    %241 = vmatprep.subr.mxu0 0.0
    %242 = vmatpush2.msra.mxu0 0.0
    %243 = vmatprep.subr.mxu0 0.0
    %244 = vmatpush2.msra.mxu0 0.0
    %245 = vmatprep.subr.mxu0 0.0
    %246 = vmatpush2.msra.mxu0 0.0
    %247 = vmatprep.subr.mxu0 0.0
    %248 = vmatpush2.msra.mxu0 0.0
    %249 = vmatprep.subr.mxu0 0.0
    %250 = vmatpush2.msra.mxu0 0.0
    %251 = vmatprep.subr.mxu0 0.0
    %252 = vmatpush2.msra.mxu0 0.0
    %253 = vmatprep.subr.mxu0 0.0
    %254 = vmatpush2.msra.mxu0 0.0
    %255 = vmatprep.subr.mxu0 0.0
    %256 = vmatpush2.msra.mxu0 0.0
    %257 = vmatprep.subr.mxu0 0.0
    %258 = vmatpush2.msra.mxu0 0.0
    %259 = vmatprep.subr.mxu0 0.0
    %260 = vmatpush2.msra.mxu0 0.0
    %261 = vmatprep.subr.mxu0 0.0
    %262 = vmatpush2.msra.mxu0 0.0
    %263 = vmatprep.mubr.f32.mxu0 0.0
    %264 = vmatmul.mubr.f32.gmra.mxu0 %v188
    %v265 = vpop.f32.mrf.mxu0
    %v266 = vadd.f32 %v169, %v265
    %v267 = vpop.f32.mrf.mxu0
    %268 = vmatprep.mubr.f32.mxu0 0.0
    %269 = vmatmul.mubr.f32.gmra.mxu0 %v191
    %v270 = vpop.f32.mrf.mxu0
    %v271 = vadd.f32 %v174, %v270
    %v272 = vpop.f32.mrf.mxu0
    %273 = vmatprep.mubr.f32.mxu0 0.0
    %274 = vmatmul.mubr.f32.gmra.mxu0 %v194
    %v275 = vpop.f32.mrf.mxu0
    %v276 = vadd.f32 %v179, %v275
    %v277 = vpop.f32.mrf.mxu0
    %278 = vmatprep.mubr.f32.mxu0 0.0
    %279 = vmatmul.mubr.f32.gmra.mxu0 %v197
    %v280 = vpop.f32.mrf.mxu0
    %v281 = vadd.f32 %v184, %v280
    %v282 = vpop.f32.mrf.mxu0
    %283 = vdwg.mxu0
    %v284 = vmax.f32 %v266, 0.0
    %v285 = vmax.f32 %v271, 0.0
    %v286 = vmax.f32 %v276, 0.0
    %v287 = vmax.f32 %v281, 0.0
    %v288 = vld [vmem:[%s5] sm:$0xff]
    %v289 = vld [vmem:[%s6] sm:$0xff]
    %291 = vset.pattern.permute.xlu0 0
    %292 = vperm.xlu0 %291, %v289
    %v293 = vpop.permute.xlu0 %292
    %v296 = vsel %vm186, %v288, 0
    %298 = vmatprep.subr.mxu0 0.0
    %299 = vmatpush1.msra.mxu0 0.0
    %300 = vmatprep.subr.mxu0 0.0
    %301 = vmatpush1.msra.mxu0 0.0
    %302 = vmatprep.subr.mxu0 0.0
    %303 = vmatpush1.msra.mxu0 0.0
    %304 = vmatprep.subr.mxu0 0.0
    %305 = vmatpush1.msra.mxu0 0.0
    %306 = vmatprep.subr.mxu0 0.0
    %307 = vmatpush1.msra.mxu0 0.0
    %308 = vmatprep.subr.mxu0 0.0
    %309 = vmatpush1.msra.mxu0 0.0
    %310 = vmatprep.subr.mxu0 0.0
    %311 = vmatpush1.msra.mxu0 0.0
    %312 = vmatprep.subr.mxu0 0.0
    %313 = vmatpush1.msra.mxu0 0.0
    %314 = vmatprep.subr.mxu0 0.0
    %315 = vmatpush1.msra.mxu0 0.0
    %316 = vmatprep.subr.mxu0 0.0
    %317 = vmatpush1.msra.mxu0 0.0
    %318 = vmatprep.subr.mxu0 0.0
    %319 = vmatpush1.msra.mxu0 0.0
    %320 = vmatprep.subr.mxu0 0.0
    %321 = vmatpush1.msra.mxu0 0.0
    %322 = vmatprep.subr.mxu0 0.0
    %323 = vmatpush1.msra.mxu0 %v287
    %324 = vmatprep.subr.mxu0 0.0
    %325 = vmatpush1.msra.mxu0 %v286
    %326 = vmatprep.subr.mxu0 0.0
    %327 = vmatpush1.msra.mxu0 %v285
    %328 = vmatprep.subr.mxu0 0.0
    %329 = vmatpush1.msra.mxu0 %v284
    %330 = vmatprep.subr.mxu0 0.0
    %331 = vmatpush2.msra.mxu0 0.0
    %332 = vmatprep.subr.mxu0 0.0
    %333 = vmatpush2.msra.mxu0 0.0
    %334 = vmatprep.subr.mxu0 0.0
    %335 = vmatpush2.msra.mxu0 0.0
    %336 = vmatprep.subr.mxu0 0.0
    %337 = vmatpush2.msra.mxu0 0.0
    %338 = vmatprep.subr.mxu0 0.0
    %339 = vmatpush2.msra.mxu0 0.0
    %340 = vmatprep.subr.mxu0 0.0
    %341 = vmatpush2.msra.mxu0 0.0
    %342 = vmatprep.subr.mxu0 0.0
    %343 = vmatpush2.msra.mxu0 0.0
    %344 = vmatprep.subr.mxu0 0.0
    %345 = vmatpush2.msra.mxu0 0.0
    %346 = vmatprep.subr.mxu0 0.0
    %347 = vmatpush2.msra.mxu0 0.0
    %348 = vmatprep.subr.mxu0 0.0
    %349 = vmatpush2.msra.mxu0 0.0
    %350 = vmatprep.subr.mxu0 0.0
    %351 = vmatpush2.msra.mxu0 0.0
    %352 = vmatprep.subr.mxu0 0.0
    %353 = vmatpush2.msra.mxu0 0.0
    %354 = vmatprep.subr.mxu0 0.0
    %355 = vmatpush2.msra.mxu0 0.0
    %356 = vmatprep.subr.mxu0 0.0
    %357 = vmatpush2.msra.mxu0 0.0
    %358 = vmatprep.subr.mxu0 0.0
    %359 = vmatpush2.msra.mxu0 0.0
    %360 = vmatprep.subr.mxu0 0.0
    %361 = vmatpush2.msra.mxu0 0.0
    %362 = vmatprep.mubr.f32.mxu0 0.0
    %363 = vmatmul.mubr.f32.gmra.mxu0 %v296
    %v364 = vpop.f32.mrf.mxu0
    %v365 = vadd.f32 %v293, %v364
    %v366 = vpop.f32.mrf.mxu0
    %367 = vdwg.mxu0
    %368 = vst [vmem:[#allocation2] sm:$0xff] %v365
    // Predicated region
    $region30: #{tpu_custom_call.1} parent=1 // pred_check
      _
    $region31: #{tpu_custom_call.1} parent=1 // pred_check_branch
      %370 = sbr.rel (0) target = $region33
    $region32: #{tpu_custom_call.1} parent=1 // pred_region
      %s372 = ssub.s32 128, 128
      %373 = vsyncadd [#allocation3], %s372
      %s375 = sshll.u32 [#allocation2], 4
      %s376 = int_to_ptr.vmem [resolvable:$true] %s375
      %378 = dma.vmem_to_hbm [thread:$0]  %s376, 128, %s7, [#allocation3]
    $region33: #{tpu_custom_call.1} parent=1 // pred_fallthru
      _
    // Predicated region
    $region34: #{tpu_custom_call.1} parent=1 // pred_check
      _
    $region35: #{tpu_custom_call.1} parent=1 // pred_check_branch
      %380 = sbr.rel (0) target = $region37
    $region36: #{tpu_custom_call.1} parent=1 // pred_region
      %381 = dma.done [#allocation3], 128
    $region37: #{tpu_custom_call.1} parent=1 // pred_fallthru
      _
    %382 = vsyncpa [#allocation3], 1

</llo_original>
